<compile_context>
chip_gen: v7x
topology: tpu7x:2x2x1
jax: 0.10.0
libtpu: 0.0.40
codegen_flags: <defaults>
</compile_context>

<pallas_src>
import functools

import jax
import jax.numpy as jnp
from jax.experimental import pallas as pl
from jax.experimental.pallas import tpu as pltpu

F32 = jnp.float32
_LANES = 128

# ---- plane indices inside the keypoint slab [_NUM_PLANES, R8, 128] --------
_PL_LIFT_P = 0      # 0,1,2 : coco-lift pred x,y,z   [B3 rows, 19 lanes]
_PL_LIFT_G = 3      # 3,4,5 : coco-lift gt   x,y,z
_PL_KP3_P = 6       # 6,7,8 : spin[25:39] pred x,y,z [B3 rows, 14 lanes]
_PL_KP3_G = 9       # 9,10,11
_PL_J2_PX = 12      # 12,13 : 2D pred x,y            [Bt rows, 49 lanes]
_PL_J2_GX = 14      # 14,15 : 2D gt   x,y
_PL_CONF = 16       # confidence weights (zero in padding)
_PL_MASK_LIFT = 17  # w3d broadcast over the 19 real lanes, zero elsewhere
_PL_MASK_KP3 = 18   # w3d broadcast over the 14 real lanes, zero elsewhere
_NUM_PLANES = 19

# ---- rows inside the SMPL slab [8, 2*Lpad] ---------------------------------
_RW_POSE_X, _RW_POSE_Y, _RW_POSE_Z = 0, 1, 2  # pred lanes [0:Lpad) | gt [Lpad:2Lpad)
_RW_POSE_MASK = 3                             # w_smpl per joint, lanes [0:Lpad)
_RW_BETA_P, _RW_BETA_G, _RW_BETA_M = 4, 5, 6  # betas flattened, lanes [0:M*10)


def _round_up(x, m):
    return ((x + m - 1) // m) * m


# ---------------------------------------------------------------------------
# Fused loss kernel.
#   kp_ref    : [19, R8, 128] f32   keypoint planes (see indices above)
#   smpl_ref  : [8, 2*Lpad]   f32   pose / betas / masks
#   scale_ref : SMEM f32[4]         [s_lift, s_kp3, s_pose, s_shape]
#   out_ref   : SMEM f32[6]         [lift, kp2d, kp3d, pose, shape, gen_loss]
# ---------------------------------------------------------------------------
def _fused_loss_kernel(kp_ref, smpl_ref, scale_ref, out_ref, *,
                       kp2d_scale, l_pad):
    # ---- pelvis-centered masked 3D keypoint MSE (1 reduce per loss) -------
    def centered_masked_sq(p0, g0, mask_plane, pa, pb):
        acc = None
        for c in range(3):                          # x, y, z planes
            pc = kp_ref[p0 + c]                     # [R8, 128] zero-cost view
            gc = kp_ref[g0 + c]
            pel = (0.5 * (pc[:, pa:pa + 1] + pc[:, pb:pb + 1])
                   - 0.5 * (gc[:, pa:pa + 1] + gc[:, pb:pb + 1]))   # [R8, 1]
            d = (pc - gc) - pel                     # lane-broadcast of pelvis
            sq = d * d
            acc = sq if acc is None else acc + sq
        # mask plane already zeroes pad rows AND pad lanes (pelvis broadcast
        # would otherwise leak into lanes >= n_joints).
        return jnp.sum(kp_ref[mask_plane] * acc)

    lift_sq = centered_masked_sq(_PL_LIFT_P, _PL_LIFT_G, _PL_MASK_LIFT, 17, 17)
    kp3_sq = centered_masked_sq(_PL_KP3_P, _PL_KP3_G, _PL_MASK_KP3, 2, 3)
    loss_lift = lift_sq * scale_ref[0]
    loss_kp3d = kp3_sq * scale_ref[1]

    # ---- confidence-weighted 2D keypoint MSE (openpose/gt weights == 1) ---
    dx = kp_ref[_PL_J2_PX] - kp_ref[_PL_J2_GX]
    dy = kp_ref[_PL_J2_PX + 1] - kp_ref[_PL_J2_GX + 1]
    loss_kp2d = jnp.sum(kp_ref[_PL_CONF] * (dx * dx + dy * dy)) * kp2d_scale

    # ---- SMPL pose loss: batch_rodrigues over pred|gt vreg-aligned halves -
    eps = 1e-8
    ax = smpl_ref[_RW_POSE_X:_RW_POSE_X + 1, :] + eps       # [1, 2*Lpad]
    ay = smpl_ref[_RW_POSE_Y:_RW_POSE_Y + 1, :] + eps
    az = smpl_ref[_RW_POSE_Z:_RW_POSE_Z + 1, :] + eps
    n2 = ax * ax + ay * ay + az * az
    inv_n = jax.lax.rsqrt(n2)                               # 1 / ||theta+eps||
    half = (n2 * inv_n) * 0.5                               # 0.5 * ||theta+eps||
    v_cos = jnp.cos(half)
    v_sin = jnp.sin(half)
    sn = v_sin * inv_n
    qw, qx, qy, qz = v_cos, sn * ax, sn * ay, sn * az
    inv_q = jax.lax.rsqrt(qw * qw + qx * qx + qy * qy + qz * qz)
    w, x, y, z = qw * inv_q, qx * inv_q, qy * inv_q, qz * inv_q
    w2, x2, y2, z2 = w * w, x * x, y * y, z * z
    wx, wy, wz = w * x, w * y, w * z
    xy, xz, yz = x * y, x * z, y * z
    comps = (w2 + x2 - y2 - z2, 2 * xy - 2 * wz, 2 * wy + 2 * xz,
             2 * wz + 2 * xy, w2 - x2 + y2 - z2, 2 * yz - 2 * wx,
             2 * xz - 2 * wy, 2 * wx + 2 * yz, w2 - x2 - y2 + z2)
    acc = None
    for r in comps:                                 # 9 VALU mul-adds, 1 reduce
        d = r[:, :l_pad] - r[:, l_pad:]             # vreg-aligned halves
        acc = d * d if acc is None else acc + d * d
    pose_mask = smpl_ref[_RW_POSE_MASK:_RW_POSE_MASK + 1, :l_pad]
    loss_pose = jnp.sum(pose_mask * acc) * scale_ref[2]

    # ---- SMPL shape (betas) loss -------------------------------------------
    db = (smpl_ref[_RW_BETA_P:_RW_BETA_P + 1, :l_pad]
          - smpl_ref[_RW_BETA_G:_RW_BETA_G + 1, :l_pad])
    beta_mask = smpl_ref[_RW_BETA_M:_RW_BETA_M + 1, :l_pad]
    loss_shape = jnp.sum(beta_mask * db * db) * scale_ref[3]

    # ---- scalar outputs to SMEM --------------------------------------------
    out_ref[0] = loss_lift
    out_ref[1] = loss_kp2d
    out_ref[2] = loss_kp3d
    out_ref[3] = loss_pose
    out_ref[4] = loss_shape
    out_ref[5] = loss_lift + loss_kp2d + loss_kp3d + loss_pose + loss_shape


# ---------------------------------------------------------------------------
# Forward pass (jitted): one fused XLA prep chain + one fused pallas_call.
# ---------------------------------------------------------------------------
def _loss_forward(generator_outputs_init, generator_outputs_lift_3d,
                  data_2d, data_3d, *, e_loss_weight, e_3d_loss_weight,
                  e_pose_loss_weight, e_shape_loss_weight):
    reduce = lambda t: t.reshape((t.shape[0] * t.shape[1],) + t.shape[2:])
    flatten = lambda t: t.reshape(-1)

    if data_2d:
        sample_2d_count = data_2d['kp_2d'].shape[0]
        real_2d = jnp.concatenate((data_2d['kp_2d'], data_3d['kp_2d']), 0)
    else:
        sample_2d_count = 0
        real_2d = data_3d['kp_2d']

    seq_len = real_2d.shape[1]
    mid = seq_len // 2
    real_2d = real_2d[:, mid:mid + 1]
    real_3d = data_3d['kp_3d'][:, mid:mid + 1]
    real_3d_theta = data_3d['theta'][:, mid:mid + 1]
    w_3d = data_3d['w_3d'][:, mid:mid + 1]
    w_smpl = data_3d['w_smpl'][:, mid:mid + 1]
    lift_3d = data_3d['coco_kp_3d'][:, mid:mid + 1]

    w3d = (flatten(w_3d) != 0).astype(F32)                   # [B3]
    wsm = (flatten(w_smpl) != 0).astype(F32)                 # [B3] (== M)

    pred_lift = generator_outputs_lift_3d[sample_2d_count:]  # [B3,19,3]
    real_lift = reduce(lift_3d)                              # [B3,19,3]

    preds = generator_outputs_init[-1]
    pred_j3d = reduce(preds['kp_3d'][sample_2d_count:])      # [B3,49,3]
    pred_theta = reduce(preds['theta'][sample_2d_count:])    # [M,85]
    pred_j2d = reduce(preds['kp_2d'])                        # [Bt,49,2]
    real_2d_r = reduce(real_2d)                              # [Bt,49,3]
    real_3d_r = reduce(real_3d)                              # [B3,49,3]
    theta_r = reduce(real_3d_theta)                          # [M,85]

    B3 = pred_lift.shape[0]
    Bt = pred_j2d.shape[0]
    M = pred_theta.shape[0]
    n_lift = pred_lift.shape[1]                              # 19
    n_kp3 = 14                                               # spin joints 25:39
    n_j2 = pred_j2d.shape[1]                                 # 49
    n_beta = pred_theta.shape[1] - 75                        # 10

    R8 = max(_round_up(Bt, 8), 8)

    # ---- keypoint slab [_NUM_PLANES, R8, 128] -------------------------------
    def plane3(x):   # [N, J, C] -> [C, R8, 128], zero padded
        x = jnp.transpose(x.astype(F32), (2, 0, 1))
        c, n, j = x.shape
        return jnp.pad(x, ((0, 0), (0, R8 - n), (0, _LANES - j)))

    def plane2(x):   # [N, J] -> [1, R8, 128], zero padded
        n, j = x.shape
        return jnp.pad(x.astype(F32), ((0, R8 - n), (0, _LANES - j)))[None]

    slab_kp = jnp.concatenate([
        plane3(pred_lift),                                   # 0-2
        plane3(real_lift),                                   # 3-5
        plane3(pred_j3d[:, 25:39, :]),                       # 6-8
        plane3(real_3d_r[:, 25:39, :]),                      # 9-11
        plane3(pred_j2d),                                    # 12-13
        plane3(real_2d_r[:, :, :2]),                         # 14-15
        plane2(real_2d_r[:, :, 2]),                          # 16 conf
        plane2(jnp.broadcast_to(w3d[:, None], (B3, n_lift))),  # 17
        plane2(jnp.broadcast_to(w3d[:, None], (B3, n_kp3))),   # 18
    ], axis=0)

    # ---- SMPL slab [8, 2*Lpad] ----------------------------------------------
    L = M * 24
    l_pad = max(_round_up(L, _LANES), _LANES)
    W = 2 * l_pad
    pp = pred_theta[:, 3:75].astype(F32).reshape(L, 3).T     # [3, L]
    gp = theta_r[:, 3:75].astype(F32).reshape(L, 3).T        # [3, L]
    pose_rows = jnp.concatenate(
        [jnp.pad(pp, ((0, 0), (0, l_pad - L))),              # pred half
         jnp.pad(gp, ((0, 0), (0, l_pad - L)))], axis=1)     # gt half  [3, W]
    pose_mask = jnp.pad(jnp.repeat(wsm, 24), (0, W - L))[None]           # [1,W]
    beta_p = jnp.pad(pred_theta[:, 75:].astype(F32).reshape(-1),
                     (0, W - M * n_beta))[None]
    beta_g = jnp.pad(theta_r[:, 75:].astype(F32).reshape(-1),
                     (0, W - M * n_beta))[None]
    beta_m = jnp.pad(jnp.repeat(wsm, n_beta), (0, W - M * n_beta))[None]
    pad_row = jnp.zeros((1, W), F32)
    slab_smpl = jnp.concatenate(
        [pose_rows, pose_mask, beta_p, beta_g, beta_m, pad_row], axis=0)  # [8,W]

    # ---- precomputed reciprocal scale factors (SMEM scalars) ----------------
    safe3 = jnp.maximum(jnp.sum(w3d), 1.0)
    safes = jnp.maximum(jnp.sum(wsm), 1.0)
    scales = jnp.stack([
        e_3d_loss_weight / (safe3 * (n_lift * 3.0)),
        e_3d_loss_weight / (safe3 * (n_kp3 * 3.0)),
        e_pose_loss_weight / (safes * 216.0),                 # 24 joints * 9
        e_shape_loss_weight / (safes * float(n_beta)),
    ]).astype(F32)

    kp2d_scale = float(e_loss_weight) / float(Bt * n_j2 * 2)

    kernel = functools.partial(_fused_loss_kernel,
                               kp2d_scale=kp2d_scale, l_pad=l_pad)

    losses = pl.pallas_call(
        kernel,
        out_shape=jax.ShapeDtypeStruct((6,), F32),
        in_specs=[
            pl.BlockSpec(memory_space=pltpu.MemorySpace.VMEM),
            pl.BlockSpec(memory_space=pltpu.MemorySpace.VMEM),
            pl.BlockSpec(memory_space=pltpu.MemorySpace.SMEM),
        ],
        out_specs=pl.BlockSpec(memory_space=pltpu.MemorySpace.SMEM),
    )(slab_kp, slab_smpl, scales)

    loss_dict = {
        'loss_kp_3d_lift': losses[0],
        'loss_kp_2d_init': losses[1],
        'loss_kp_3d_init': losses[2],
        'loss_pose_init': losses[3],
        'loss_shape_init': losses[4],
    }
    gen_loss = losses[5]
    return gen_loss, loss_dict


class LossPallas:
    def __init__(self, e_loss_weight=60.0, e_3d_loss_weight=30.0,
                 e_pose_loss_weight=1.0, e_shape_loss_weight=0.001,
                 d_motion_loss_weight=1.0, vel_or_accel_2d_weight=50,
                 vel_or_accel_3d_weight=100, use_accel=True):
        self.e_loss_weight = e_loss_weight
        self.e_3d_loss_weight = e_3d_loss_weight
        self.e_pose_loss_weight = e_pose_loss_weight
        self.e_shape_loss_weight = e_shape_loss_weight
        self.d_motion_loss_weight = d_motion_loss_weight
        self.vel_or_accel_2d_weight = vel_or_accel_2d_weight
        self.vel_or_accel_3d_weight = vel_or_accel_3d_weight
        self.use_accel = use_accel
        self._forward = jax.jit(functools.partial(
            _loss_forward,
            e_loss_weight=float(e_loss_weight),
            e_3d_loss_weight=float(e_3d_loss_weight),
            e_pose_loss_weight=float(e_pose_loss_weight),
            e_shape_loss_weight=float(e_shape_loss_weight)))

    def __call__(self, generator_outputs_init, generator_outputs_lift_3d,
                 data_2d, data_3d, joint_guide=None,
                 generator_outputs_inter=None, generator_outputs_final=None):
        # TODO(synk): joint_guide branch needs convert_kps_torch (spin->coco
        # joint regressor) which is not defined in this module; not implemented.
        # TODO(synk): generator_outputs_inter/final branches unpack 6 values
        # from cal_loss (which returns 4) in the original code and are
        # therefore unreachable as written; not implemented.
        return self._forward(generator_outputs_init,
                             generator_outputs_lift_3d, data_2d, data_3d)


if __name__ == "__main__":
    key = jax.random.PRNGKey(0)
    B2, B3, T = 2, 2, 8
    Btot = B2 + B3
    ks = jax.random.split(key, 9)

    data_2d = {'kp_2d': jax.random.normal(ks[0], (B2, T, 49, 3), F32)}
    data_3d = {
        'kp_2d': jax.random.normal(ks[1], (B3, T, 49, 3), F32),
        'kp_3d': jax.random.normal(ks[2], (B3, T, 49, 3), F32),
        'theta': jax.random.normal(ks[3], (B3, T, 85), F32),
        'w_3d': jnp.ones((B3, T), F32),
        'w_smpl': jnp.concatenate(
            [jnp.ones((1, T), F32), jnp.zeros((1, T), F32)], axis=0),
        'coco_kp_3d': jax.random.normal(ks[4], (B3, T, 19, 3), F32),
    }
    generator_outputs_lift_3d = jax.random.normal(ks[5], (Btot, 19, 3), F32)
    generator_outputs_init = [{
        'kp_2d': jax.random.normal(ks[6], (Btot, 1, 49, 2), F32),
        'kp_3d': jax.random.normal(ks[7], (Btot, 1, 49, 3), F32),
        'theta': jax.random.normal(ks[8], (Btot, 1, 85), F32),
    }]

    loss_mod = LossPallas()
    gen_loss, loss_dict = loss_mod(generator_outputs_init,
                                   generator_outputs_lift_3d,
                                   data_2d, data_3d)
    jax.block_until_ready(gen_loss)
    print("KERNEL_OK")
</pallas_src>

<mosaic_0001>
module attributes {stable_mosaic.version = 11 : i64} {
  func.func @_fused_loss_kernel(%arg0: memref<19x8x128xf32, #tpu.memory_space<vmem>>, %arg1: memref<8x256xf32, #tpu.memory_space<vmem>>, %arg2: memref<4xf32, #tpu.memory_space<smem>>, %arg3: memref<6xf32, #tpu.memory_space<smem>>) attributes {dimension_semantics = [], scalar_prefetch = 0 : i64, scratch_operands = 0 : i64, tpu.core_type = #tpu.core_type<tc>} {
    %c0 = arith.constant 0 : index
    %c0_0 = arith.constant 0 : index
    %c0_1 = arith.constant 0 : index
    %0 = vector.load %arg0[%c0, %c0_0, %c0_1] : memref<19x8x128xf32, #tpu.memory_space<vmem>>, vector<1x8x128xf32>
    %1 = vector.shape_cast %0 : vector<1x8x128xf32> to vector<8x128xf32>
    %c3 = arith.constant 3 : index
    %c0_2 = arith.constant 0 : index
    %c0_3 = arith.constant 0 : index
    %2 = vector.load %arg0[%c3, %c0_2, %c0_3] : memref<19x8x128xf32, #tpu.memory_space<vmem>>, vector<1x8x128xf32>
    %3 = vector.shape_cast %2 : vector<1x8x128xf32> to vector<8x128xf32>
    %4 = vector.extract_strided_slice %1 {offsets = [0, 17], sizes = [8, 1], strides = [1, 1]} : vector<8x128xf32> to vector<8x1xf32>
    %5 = vector.extract_strided_slice %1 {offsets = [0, 17], sizes = [8, 1], strides = [1, 1]} : vector<8x128xf32> to vector<8x1xf32>
    %6 = arith.addf %4, %5 : vector<8x1xf32>
    %cst = arith.constant 5.000000e-01 : f32
    %7 = vector.broadcast %cst : f32 to vector<8x1xf32>
    %8 = arith.mulf %7, %6 : vector<8x1xf32>
    %9 = vector.extract_strided_slice %3 {offsets = [0, 17], sizes = [8, 1], strides = [1, 1]} : vector<8x128xf32> to vector<8x1xf32>
    %10 = vector.extract_strided_slice %3 {offsets = [0, 17], sizes = [8, 1], strides = [1, 1]} : vector<8x128xf32> to vector<8x1xf32>
    %11 = arith.addf %9, %10 : vector<8x1xf32>
    %cst_4 = arith.constant 5.000000e-01 : f32
    %12 = vector.broadcast %cst_4 : f32 to vector<8x1xf32>
    %13 = arith.mulf %12, %11 : vector<8x1xf32>
    %14 = arith.subf %8, %13 : vector<8x1xf32>
    %15 = arith.subf %1, %3 : vector<8x128xf32>
    %16 = vector.broadcast %14 : vector<8x1xf32> to vector<8x128xf32>
    %17 = arith.subf %15, %16 : vector<8x128xf32>
    %18 = arith.mulf %17, %17 : vector<8x128xf32>
    %c1 = arith.constant 1 : index
    %c0_5 = arith.constant 0 : index
    %c0_6 = arith.constant 0 : index
    %19 = vector.load %arg0[%c1, %c0_5, %c0_6] : memref<19x8x128xf32, #tpu.memory_space<vmem>>, vector<1x8x128xf32>
    %20 = vector.shape_cast %19 : vector<1x8x128xf32> to vector<8x128xf32>
    %c4 = arith.constant 4 : index
    %c0_7 = arith.constant 0 : index
    %c0_8 = arith.constant 0 : index
    %21 = vector.load %arg0[%c4, %c0_7, %c0_8] : memref<19x8x128xf32, #tpu.memory_space<vmem>>, vector<1x8x128xf32>
    %22 = vector.shape_cast %21 : vector<1x8x128xf32> to vector<8x128xf32>
    %23 = vector.extract_strided_slice %20 {offsets = [0, 17], sizes = [8, 1], strides = [1, 1]} : vector<8x128xf32> to vector<8x1xf32>
    %24 = vector.extract_strided_slice %20 {offsets = [0, 17], sizes = [8, 1], strides = [1, 1]} : vector<8x128xf32> to vector<8x1xf32>
    %25 = arith.addf %23, %24 : vector<8x1xf32>
    %cst_9 = arith.constant 5.000000e-01 : f32
    %26 = vector.broadcast %cst_9 : f32 to vector<8x1xf32>
    %27 = arith.mulf %26, %25 : vector<8x1xf32>
    %28 = vector.extract_strided_slice %22 {offsets = [0, 17], sizes = [8, 1], strides = [1, 1]} : vector<8x128xf32> to vector<8x1xf32>
    %29 = vector.extract_strided_slice %22 {offsets = [0, 17], sizes = [8, 1], strides = [1, 1]} : vector<8x128xf32> to vector<8x1xf32>
    %30 = arith.addf %28, %29 : vector<8x1xf32>
    %cst_10 = arith.constant 5.000000e-01 : f32
    %31 = vector.broadcast %cst_10 : f32 to vector<8x1xf32>
    %32 = arith.mulf %31, %30 : vector<8x1xf32>
    %33 = arith.subf %27, %32 : vector<8x1xf32>
    %34 = arith.subf %20, %22 : vector<8x128xf32>
    %35 = vector.broadcast %33 : vector<8x1xf32> to vector<8x128xf32>
    %36 = arith.subf %34, %35 : vector<8x128xf32>
    %37 = arith.mulf %36, %36 : vector<8x128xf32>
    %38 = arith.addf %18, %37 : vector<8x128xf32>
    %c2 = arith.constant 2 : index
    %c0_11 = arith.constant 0 : index
    %c0_12 = arith.constant 0 : index
    %39 = vector.load %arg0[%c2, %c0_11, %c0_12] : memref<19x8x128xf32, #tpu.memory_space<vmem>>, vector<1x8x128xf32>
    %40 = vector.shape_cast %39 : vector<1x8x128xf32> to vector<8x128xf32>
    %c5 = arith.constant 5 : index
    %c0_13 = arith.constant 0 : index
    %c0_14 = arith.constant 0 : index
    %41 = vector.load %arg0[%c5, %c0_13, %c0_14] : memref<19x8x128xf32, #tpu.memory_space<vmem>>, vector<1x8x128xf32>
    %42 = vector.shape_cast %41 : vector<1x8x128xf32> to vector<8x128xf32>
    %43 = vector.extract_strided_slice %40 {offsets = [0, 17], sizes = [8, 1], strides = [1, 1]} : vector<8x128xf32> to vector<8x1xf32>
    %44 = vector.extract_strided_slice %40 {offsets = [0, 17], sizes = [8, 1], strides = [1, 1]} : vector<8x128xf32> to vector<8x1xf32>
    %45 = arith.addf %43, %44 : vector<8x1xf32>
    %cst_15 = arith.constant 5.000000e-01 : f32
    %46 = vector.broadcast %cst_15 : f32 to vector<8x1xf32>
    %47 = arith.mulf %46, %45 : vector<8x1xf32>
    %48 = vector.extract_strided_slice %42 {offsets = [0, 17], sizes = [8, 1], strides = [1, 1]} : vector<8x128xf32> to vector<8x1xf32>
    %49 = vector.extract_strided_slice %42 {offsets = [0, 17], sizes = [8, 1], strides = [1, 1]} : vector<8x128xf32> to vector<8x1xf32>
    %50 = arith.addf %48, %49 : vector<8x1xf32>
    %cst_16 = arith.constant 5.000000e-01 : f32
    %51 = vector.broadcast %cst_16 : f32 to vector<8x1xf32>
    %52 = arith.mulf %51, %50 : vector<8x1xf32>
    %53 = arith.subf %47, %52 : vector<8x1xf32>
    %54 = arith.subf %40, %42 : vector<8x128xf32>
    %55 = vector.broadcast %53 : vector<8x1xf32> to vector<8x128xf32>
    %56 = arith.subf %54, %55 : vector<8x128xf32>
    %57 = arith.mulf %56, %56 : vector<8x128xf32>
    %58 = arith.addf %38, %57 : vector<8x128xf32>
    %c17 = arith.constant 17 : index
    %c0_17 = arith.constant 0 : index
    %c0_18 = arith.constant 0 : index
    %59 = vector.load %arg0[%c17, %c0_17, %c0_18] : memref<19x8x128xf32, #tpu.memory_space<vmem>>, vector<1x8x128xf32>
    %60 = vector.shape_cast %59 : vector<1x8x128xf32> to vector<8x128xf32>
    %61 = arith.mulf %60, %58 : vector<8x128xf32>
    %62 = vector.shape_cast %61 : vector<8x128xf32> to vector<1x8x128xf32>
    %cst_19 = arith.constant dense<0.000000e+00> : vector<1xf32>
    %63 = vector.multi_reduction <add>, %62, %cst_19 [1, 2] : vector<1x8x128xf32> to vector<1xf32>
    %64 = vector.shape_cast %63 : vector<1xf32> to vector<1x1x1xf32>
    %65 = vector.extract %64[0, 0, 0] : f32 from vector<1x1x1xf32>
    %c6 = arith.constant 6 : index
    %c0_20 = arith.constant 0 : index
    %c0_21 = arith.constant 0 : index
    %66 = vector.load %arg0[%c6, %c0_20, %c0_21] : memref<19x8x128xf32, #tpu.memory_space<vmem>>, vector<1x8x128xf32>
    %67 = vector.shape_cast %66 : vector<1x8x128xf32> to vector<8x128xf32>
    %c9 = arith.constant 9 : index
    %c0_22 = arith.constant 0 : index
    %c0_23 = arith.constant 0 : index
    %68 = vector.load %arg0[%c9, %c0_22, %c0_23] : memref<19x8x128xf32, #tpu.memory_space<vmem>>, vector<1x8x128xf32>
    %69 = vector.shape_cast %68 : vector<1x8x128xf32> to vector<8x128xf32>
    %70 = vector.extract_strided_slice %67 {offsets = [0, 2], sizes = [8, 1], strides = [1, 1]} : vector<8x128xf32> to vector<8x1xf32>
    %71 = vector.extract_strided_slice %67 {offsets = [0, 3], sizes = [8, 1], strides = [1, 1]} : vector<8x128xf32> to vector<8x1xf32>
    %72 = arith.addf %70, %71 : vector<8x1xf32>
    %cst_24 = arith.constant 5.000000e-01 : f32
    %73 = vector.broadcast %cst_24 : f32 to vector<8x1xf32>
    %74 = arith.mulf %73, %72 : vector<8x1xf32>
    %75 = vector.extract_strided_slice %69 {offsets = [0, 2], sizes = [8, 1], strides = [1, 1]} : vector<8x128xf32> to vector<8x1xf32>
    %76 = vector.extract_strided_slice %69 {offsets = [0, 3], sizes = [8, 1], strides = [1, 1]} : vector<8x128xf32> to vector<8x1xf32>
    %77 = arith.addf %75, %76 : vector<8x1xf32>
    %cst_25 = arith.constant 5.000000e-01 : f32
    %78 = vector.broadcast %cst_25 : f32 to vector<8x1xf32>
    %79 = arith.mulf %78, %77 : vector<8x1xf32>
    %80 = arith.subf %74, %79 : vector<8x1xf32>
    %81 = arith.subf %67, %69 : vector<8x128xf32>
    %82 = vector.broadcast %80 : vector<8x1xf32> to vector<8x128xf32>
    %83 = arith.subf %81, %82 : vector<8x128xf32>
    %84 = arith.mulf %83, %83 : vector<8x128xf32>
    %c7 = arith.constant 7 : index
    %c0_26 = arith.constant 0 : index
    %c0_27 = arith.constant 0 : index
    %85 = vector.load %arg0[%c7, %c0_26, %c0_27] : memref<19x8x128xf32, #tpu.memory_space<vmem>>, vector<1x8x128xf32>
    %86 = vector.shape_cast %85 : vector<1x8x128xf32> to vector<8x128xf32>
    %c10 = arith.constant 10 : index
    %c0_28 = arith.constant 0 : index
    %c0_29 = arith.constant 0 : index
    %87 = vector.load %arg0[%c10, %c0_28, %c0_29] : memref<19x8x128xf32, #tpu.memory_space<vmem>>, vector<1x8x128xf32>
    %88 = vector.shape_cast %87 : vector<1x8x128xf32> to vector<8x128xf32>
    %89 = vector.extract_strided_slice %86 {offsets = [0, 2], sizes = [8, 1], strides = [1, 1]} : vector<8x128xf32> to vector<8x1xf32>
    %90 = vector.extract_strided_slice %86 {offsets = [0, 3], sizes = [8, 1], strides = [1, 1]} : vector<8x128xf32> to vector<8x1xf32>
    %91 = arith.addf %89, %90 : vector<8x1xf32>
    %cst_30 = arith.constant 5.000000e-01 : f32
    %92 = vector.broadcast %cst_30 : f32 to vector<8x1xf32>
    %93 = arith.mulf %92, %91 : vector<8x1xf32>
    %94 = vector.extract_strided_slice %88 {offsets = [0, 2], sizes = [8, 1], strides = [1, 1]} : vector<8x128xf32> to vector<8x1xf32>
    %95 = vector.extract_strided_slice %88 {offsets = [0, 3], sizes = [8, 1], strides = [1, 1]} : vector<8x128xf32> to vector<8x1xf32>
    %96 = arith.addf %94, %95 : vector<8x1xf32>
    %cst_31 = arith.constant 5.000000e-01 : f32
    %97 = vector.broadcast %cst_31 : f32 to vector<8x1xf32>
    %98 = arith.mulf %97, %96 : vector<8x1xf32>
    %99 = arith.subf %93, %98 : vector<8x1xf32>
    %100 = arith.subf %86, %88 : vector<8x128xf32>
    %101 = vector.broadcast %99 : vector<8x1xf32> to vector<8x128xf32>
    %102 = arith.subf %100, %101 : vector<8x128xf32>
    %103 = arith.mulf %102, %102 : vector<8x128xf32>
    %104 = arith.addf %84, %103 : vector<8x128xf32>
    %c8 = arith.constant 8 : index
    %c0_32 = arith.constant 0 : index
    %c0_33 = arith.constant 0 : index
    %105 = vector.load %arg0[%c8, %c0_32, %c0_33] : memref<19x8x128xf32, #tpu.memory_space<vmem>>, vector<1x8x128xf32>
    %106 = vector.shape_cast %105 : vector<1x8x128xf32> to vector<8x128xf32>
    %c11 = arith.constant 11 : index
    %c0_34 = arith.constant 0 : index
    %c0_35 = arith.constant 0 : index
    %107 = vector.load %arg0[%c11, %c0_34, %c0_35] : memref<19x8x128xf32, #tpu.memory_space<vmem>>, vector<1x8x128xf32>
    %108 = vector.shape_cast %107 : vector<1x8x128xf32> to vector<8x128xf32>
    %109 = vector.extract_strided_slice %106 {offsets = [0, 2], sizes = [8, 1], strides = [1, 1]} : vector<8x128xf32> to vector<8x1xf32>
    %110 = vector.extract_strided_slice %106 {offsets = [0, 3], sizes = [8, 1], strides = [1, 1]} : vector<8x128xf32> to vector<8x1xf32>
    %111 = arith.addf %109, %110 : vector<8x1xf32>
    %cst_36 = arith.constant 5.000000e-01 : f32
    %112 = vector.broadcast %cst_36 : f32 to vector<8x1xf32>
    %113 = arith.mulf %112, %111 : vector<8x1xf32>
    %114 = vector.extract_strided_slice %108 {offsets = [0, 2], sizes = [8, 1], strides = [1, 1]} : vector<8x128xf32> to vector<8x1xf32>
    %115 = vector.extract_strided_slice %108 {offsets = [0, 3], sizes = [8, 1], strides = [1, 1]} : vector<8x128xf32> to vector<8x1xf32>
    %116 = arith.addf %114, %115 : vector<8x1xf32>
    %cst_37 = arith.constant 5.000000e-01 : f32
    %117 = vector.broadcast %cst_37 : f32 to vector<8x1xf32>
    %118 = arith.mulf %117, %116 : vector<8x1xf32>
    %119 = arith.subf %113, %118 : vector<8x1xf32>
    %120 = arith.subf %106, %108 : vector<8x128xf32>
    %121 = vector.broadcast %119 : vector<8x1xf32> to vector<8x128xf32>
    %122 = arith.subf %120, %121 : vector<8x128xf32>
    %123 = arith.mulf %122, %122 : vector<8x128xf32>
    %124 = arith.addf %104, %123 : vector<8x128xf32>
    %c18 = arith.constant 18 : index
    %c0_38 = arith.constant 0 : index
    %c0_39 = arith.constant 0 : index
    %125 = vector.load %arg0[%c18, %c0_38, %c0_39] : memref<19x8x128xf32, #tpu.memory_space<vmem>>, vector<1x8x128xf32>
    %126 = vector.shape_cast %125 : vector<1x8x128xf32> to vector<8x128xf32>
    %127 = arith.mulf %126, %124 : vector<8x128xf32>
    %128 = vector.shape_cast %127 : vector<8x128xf32> to vector<1x8x128xf32>
    %cst_40 = arith.constant dense<0.000000e+00> : vector<1xf32>
    %129 = vector.multi_reduction <add>, %128, %cst_40 [1, 2] : vector<1x8x128xf32> to vector<1xf32>
    %130 = vector.shape_cast %129 : vector<1xf32> to vector<1x1x1xf32>
    %131 = vector.extract %130[0, 0, 0] : f32 from vector<1x1x1xf32>
    %c0_41 = arith.constant 0 : index
    %132 = memref.load %arg2[%c0_41] : memref<4xf32, #tpu.memory_space<smem>>
    %133 = arith.mulf %65, %132 : f32
    %c1_42 = arith.constant 1 : index
    %134 = memref.load %arg2[%c1_42] : memref<4xf32, #tpu.memory_space<smem>>
    %135 = arith.mulf %131, %134 : f32
    %c12 = arith.constant 12 : index
    %c0_43 = arith.constant 0 : index
    %c0_44 = arith.constant 0 : index
    %136 = vector.load %arg0[%c12, %c0_43, %c0_44] : memref<19x8x128xf32, #tpu.memory_space<vmem>>, vector<1x8x128xf32>
    %137 = vector.shape_cast %136 : vector<1x8x128xf32> to vector<8x128xf32>
    %c14 = arith.constant 14 : index
    %c0_45 = arith.constant 0 : index
    %c0_46 = arith.constant 0 : index
    %138 = vector.load %arg0[%c14, %c0_45, %c0_46] : memref<19x8x128xf32, #tpu.memory_space<vmem>>, vector<1x8x128xf32>
    %139 = vector.shape_cast %138 : vector<1x8x128xf32> to vector<8x128xf32>
    %140 = arith.subf %137, %139 : vector<8x128xf32>
    %c13 = arith.constant 13 : index
    %c0_47 = arith.constant 0 : index
    %c0_48 = arith.constant 0 : index
    %141 = vector.load %arg0[%c13, %c0_47, %c0_48] : memref<19x8x128xf32, #tpu.memory_space<vmem>>, vector<1x8x128xf32>
    %142 = vector.shape_cast %141 : vector<1x8x128xf32> to vector<8x128xf32>
    %c15 = arith.constant 15 : index
    %c0_49 = arith.constant 0 : index
    %c0_50 = arith.constant 0 : index
    %143 = vector.load %arg0[%c15, %c0_49, %c0_50] : memref<19x8x128xf32, #tpu.memory_space<vmem>>, vector<1x8x128xf32>
    %144 = vector.shape_cast %143 : vector<1x8x128xf32> to vector<8x128xf32>
    %145 = arith.subf %142, %144 : vector<8x128xf32>
    %c16 = arith.constant 16 : index
    %c0_51 = arith.constant 0 : index
    %c0_52 = arith.constant 0 : index
    %146 = vector.load %arg0[%c16, %c0_51, %c0_52] : memref<19x8x128xf32, #tpu.memory_space<vmem>>, vector<1x8x128xf32>
    %147 = vector.shape_cast %146 : vector<1x8x128xf32> to vector<8x128xf32>
    %148 = arith.mulf %140, %140 : vector<8x128xf32>
    %149 = arith.mulf %145, %145 : vector<8x128xf32>
    %150 = arith.addf %148, %149 : vector<8x128xf32>
    %151 = arith.mulf %147, %150 : vector<8x128xf32>
    %152 = vector.shape_cast %151 : vector<8x128xf32> to vector<1x8x128xf32>
    %cst_53 = arith.constant dense<0.000000e+00> : vector<1xf32>
    %153 = vector.multi_reduction <add>, %152, %cst_53 [1, 2] : vector<1x8x128xf32> to vector<1xf32>
    %154 = vector.shape_cast %153 : vector<1xf32> to vector<1x1x1xf32>
    %155 = vector.extract %154[0, 0, 0] : f32 from vector<1x1x1xf32>
    %cst_54 = arith.constant 0.153061226 : f32
    %156 = arith.mulf %155, %cst_54 : f32
    %c0_55 = arith.constant 0 : index
    %c0_56 = arith.constant 0 : index
    %157 = vector.load %arg1[%c0_55, %c0_56] : memref<8x256xf32, #tpu.memory_space<vmem>>, vector<1x256xf32>
    %cst_57 = arith.constant 9.99999993E-9 : f32
    %158 = vector.broadcast %cst_57 : f32 to vector<1x256xf32>
    %159 = arith.addf %157, %158 : vector<1x256xf32>
    %c1_58 = arith.constant 1 : index
    %c0_59 = arith.constant 0 : index
    %160 = vector.load %arg1[%c1_58, %c0_59] : memref<8x256xf32, #tpu.memory_space<vmem>>, vector<1x256xf32>
    %cst_60 = arith.constant 9.99999993E-9 : f32
    %161 = vector.broadcast %cst_60 : f32 to vector<1x256xf32>
    %162 = arith.addf %160, %161 : vector<1x256xf32>
    %c2_61 = arith.constant 2 : index
    %c0_62 = arith.constant 0 : index
    %163 = vector.load %arg1[%c2_61, %c0_62] : memref<8x256xf32, #tpu.memory_space<vmem>>, vector<1x256xf32>
    %cst_63 = arith.constant 9.99999993E-9 : f32
    %164 = vector.broadcast %cst_63 : f32 to vector<1x256xf32>
    %165 = arith.addf %163, %164 : vector<1x256xf32>
    %166 = arith.mulf %159, %159 : vector<1x256xf32>
    %167 = arith.mulf %162, %162 : vector<1x256xf32>
    %168 = arith.addf %166, %167 : vector<1x256xf32>
    %169 = arith.mulf %165, %165 : vector<1x256xf32>
    %170 = arith.addf %168, %169 : vector<1x256xf32>
    %171 = math.rsqrt %170 : vector<1x256xf32>
    %172 = arith.mulf %170, %171 : vector<1x256xf32>
    %cst_64 = arith.constant 5.000000e-01 : f32
    %173 = vector.broadcast %cst_64 : f32 to vector<1x256xf32>
    %174 = arith.mulf %172, %173 : vector<1x256xf32>
    %175 = math.cos %174 : vector<1x256xf32>
    %176 = math.sin %174 : vector<1x256xf32>
    %177 = arith.mulf %176, %171 : vector<1x256xf32>
    %178 = arith.mulf %177, %159 : vector<1x256xf32>
    %179 = arith.mulf %177, %162 : vector<1x256xf32>
    %180 = arith.mulf %177, %165 : vector<1x256xf32>
    %181 = arith.mulf %175, %175 : vector<1x256xf32>
    %182 = arith.mulf %178, %178 : vector<1x256xf32>
    %183 = arith.addf %181, %182 : vector<1x256xf32>
    %184 = arith.mulf %179, %179 : vector<1x256xf32>
    %185 = arith.addf %183, %184 : vector<1x256xf32>
    %186 = arith.mulf %180, %180 : vector<1x256xf32>
    %187 = arith.addf %185, %186 : vector<1x256xf32>
    %188 = math.rsqrt %187 : vector<1x256xf32>
    %189 = arith.mulf %175, %188 : vector<1x256xf32>
    %190 = arith.mulf %178, %188 : vector<1x256xf32>
    %191 = arith.mulf %179, %188 : vector<1x256xf32>
    %192 = arith.mulf %180, %188 : vector<1x256xf32>
    %193 = arith.mulf %189, %189 : vector<1x256xf32>
    %194 = arith.mulf %190, %190 : vector<1x256xf32>
    %195 = arith.mulf %191, %191 : vector<1x256xf32>
    %196 = arith.mulf %192, %192 : vector<1x256xf32>
    %197 = arith.mulf %189, %190 : vector<1x256xf32>
    %198 = arith.mulf %189, %191 : vector<1x256xf32>
    %199 = arith.mulf %189, %192 : vector<1x256xf32>
    %200 = arith.mulf %190, %191 : vector<1x256xf32>
    %201 = arith.mulf %190, %192 : vector<1x256xf32>
    %202 = arith.mulf %191, %192 : vector<1x256xf32>
    %203 = arith.addf %193, %194 : vector<1x256xf32>
    %204 = arith.subf %203, %195 : vector<1x256xf32>
    %205 = arith.subf %204, %196 : vector<1x256xf32>
    %cst_65 = arith.constant 2.000000e+00 : f32
    %206 = vector.broadcast %cst_65 : f32 to vector<1x256xf32>
    %207 = arith.mulf %206, %200 : vector<1x256xf32>
    %cst_66 = arith.constant 2.000000e+00 : f32
    %208 = vector.broadcast %cst_66 : f32 to vector<1x256xf32>
    %209 = arith.mulf %208, %199 : vector<1x256xf32>
    %210 = arith.subf %207, %209 : vector<1x256xf32>
    %cst_67 = arith.constant 2.000000e+00 : f32
    %211 = vector.broadcast %cst_67 : f32 to vector<1x256xf32>
    %212 = arith.mulf %211, %198 : vector<1x256xf32>
    %cst_68 = arith.constant 2.000000e+00 : f32
    %213 = vector.broadcast %cst_68 : f32 to vector<1x256xf32>
    %214 = arith.mulf %213, %201 : vector<1x256xf32>
    %215 = arith.addf %212, %214 : vector<1x256xf32>
    %cst_69 = arith.constant 2.000000e+00 : f32
    %216 = vector.broadcast %cst_69 : f32 to vector<1x256xf32>
    %217 = arith.mulf %216, %199 : vector<1x256xf32>
    %cst_70 = arith.constant 2.000000e+00 : f32
    %218 = vector.broadcast %cst_70 : f32 to vector<1x256xf32>
    %219 = arith.mulf %218, %200 : vector<1x256xf32>
    %220 = arith.addf %217, %219 : vector<1x256xf32>
    %221 = arith.subf %193, %194 : vector<1x256xf32>
    %222 = arith.addf %221, %195 : vector<1x256xf32>
    %223 = arith.subf %222, %196 : vector<1x256xf32>
    %cst_71 = arith.constant 2.000000e+00 : f32
    %224 = vector.broadcast %cst_71 : f32 to vector<1x256xf32>
    %225 = arith.mulf %224, %202 : vector<1x256xf32>
    %cst_72 = arith.constant 2.000000e+00 : f32
    %226 = vector.broadcast %cst_72 : f32 to vector<1x256xf32>
    %227 = arith.mulf %226, %197 : vector<1x256xf32>
    %228 = arith.subf %225, %227 : vector<1x256xf32>
    %cst_73 = arith.constant 2.000000e+00 : f32
    %229 = vector.broadcast %cst_73 : f32 to vector<1x256xf32>
    %230 = arith.mulf %229, %201 : vector<1x256xf32>
    %cst_74 = arith.constant 2.000000e+00 : f32
    %231 = vector.broadcast %cst_74 : f32 to vector<1x256xf32>
    %232 = arith.mulf %231, %198 : vector<1x256xf32>
    %233 = arith.subf %230, %232 : vector<1x256xf32>
    %cst_75 = arith.constant 2.000000e+00 : f32
    %234 = vector.broadcast %cst_75 : f32 to vector<1x256xf32>
    %235 = arith.mulf %234, %197 : vector<1x256xf32>
    %cst_76 = arith.constant 2.000000e+00 : f32
    %236 = vector.broadcast %cst_76 : f32 to vector<1x256xf32>
    %237 = arith.mulf %236, %202 : vector<1x256xf32>
    %238 = arith.addf %235, %237 : vector<1x256xf32>
    %239 = arith.subf %193, %194 : vector<1x256xf32>
    %240 = arith.subf %239, %195 : vector<1x256xf32>
    %241 = arith.addf %240, %196 : vector<1x256xf32>
    %242 = vector.extract_strided_slice %205 {offsets = [0, 0], sizes = [1, 128], strides = [1, 1]} : vector<1x256xf32> to vector<1x128xf32>
    %243 = vector.extract_strided_slice %205 {offsets = [0, 128], sizes = [1, 128], strides = [1, 1]} : vector<1x256xf32> to vector<1x128xf32>
    %244 = arith.subf %242, %243 : vector<1x128xf32>
    %245 = arith.mulf %244, %244 : vector<1x128xf32>
    %246 = vector.extract_strided_slice %210 {offsets = [0, 0], sizes = [1, 128], strides = [1, 1]} : vector<1x256xf32> to vector<1x128xf32>
    %247 = vector.extract_strided_slice %210 {offsets = [0, 128], sizes = [1, 128], strides = [1, 1]} : vector<1x256xf32> to vector<1x128xf32>
    %248 = arith.subf %246, %247 : vector<1x128xf32>
    %249 = arith.mulf %248, %248 : vector<1x128xf32>
    %250 = arith.addf %245, %249 : vector<1x128xf32>
    %251 = vector.extract_strided_slice %215 {offsets = [0, 0], sizes = [1, 128], strides = [1, 1]} : vector<1x256xf32> to vector<1x128xf32>
    %252 = vector.extract_strided_slice %215 {offsets = [0, 128], sizes = [1, 128], strides = [1, 1]} : vector<1x256xf32> to vector<1x128xf32>
    %253 = arith.subf %251, %252 : vector<1x128xf32>
    %254 = arith.mulf %253, %253 : vector<1x128xf32>
    %255 = arith.addf %250, %254 : vector<1x128xf32>
    %256 = vector.extract_strided_slice %220 {offsets = [0, 0], sizes = [1, 128], strides = [1, 1]} : vector<1x256xf32> to vector<1x128xf32>
    %257 = vector.extract_strided_slice %220 {offsets = [0, 128], sizes = [1, 128], strides = [1, 1]} : vector<1x256xf32> to vector<1x128xf32>
    %258 = arith.subf %256, %257 : vector<1x128xf32>
    %259 = arith.mulf %258, %258 : vector<1x128xf32>
    %260 = arith.addf %255, %259 : vector<1x128xf32>
    %261 = vector.extract_strided_slice %223 {offsets = [0, 0], sizes = [1, 128], strides = [1, 1]} : vector<1x256xf32> to vector<1x128xf32>
    %262 = vector.extract_strided_slice %223 {offsets = [0, 128], sizes = [1, 128], strides = [1, 1]} : vector<1x256xf32> to vector<1x128xf32>
    %263 = arith.subf %261, %262 : vector<1x128xf32>
    %264 = arith.mulf %263, %263 : vector<1x128xf32>
    %265 = arith.addf %260, %264 : vector<1x128xf32>
    %266 = vector.extract_strided_slice %228 {offsets = [0, 0], sizes = [1, 128], strides = [1, 1]} : vector<1x256xf32> to vector<1x128xf32>
    %267 = vector.extract_strided_slice %228 {offsets = [0, 128], sizes = [1, 128], strides = [1, 1]} : vector<1x256xf32> to vector<1x128xf32>
    %268 = arith.subf %266, %267 : vector<1x128xf32>
    %269 = arith.mulf %268, %268 : vector<1x128xf32>
    %270 = arith.addf %265, %269 : vector<1x128xf32>
    %271 = vector.extract_strided_slice %233 {offsets = [0, 0], sizes = [1, 128], strides = [1, 1]} : vector<1x256xf32> to vector<1x128xf32>
    %272 = vector.extract_strided_slice %233 {offsets = [0, 128], sizes = [1, 128], strides = [1, 1]} : vector<1x256xf32> to vector<1x128xf32>
    %273 = arith.subf %271, %272 : vector<1x128xf32>
    %274 = arith.mulf %273, %273 : vector<1x128xf32>
    %275 = arith.addf %270, %274 : vector<1x128xf32>
    %276 = vector.extract_strided_slice %238 {offsets = [0, 0], sizes = [1, 128], strides = [1, 1]} : vector<1x256xf32> to vector<1x128xf32>
    %277 = vector.extract_strided_slice %238 {offsets = [0, 128], sizes = [1, 128], strides = [1, 1]} : vector<1x256xf32> to vector<1x128xf32>
    %278 = arith.subf %276, %277 : vector<1x128xf32>
    %279 = arith.mulf %278, %278 : vector<1x128xf32>
    %280 = arith.addf %275, %279 : vector<1x128xf32>
    %281 = vector.extract_strided_slice %241 {offsets = [0, 0], sizes = [1, 128], strides = [1, 1]} : vector<1x256xf32> to vector<1x128xf32>
    %282 = vector.extract_strided_slice %241 {offsets = [0, 128], sizes = [1, 128], strides = [1, 1]} : vector<1x256xf32> to vector<1x128xf32>
    %283 = arith.subf %281, %282 : vector<1x128xf32>
    %284 = arith.mulf %283, %283 : vector<1x128xf32>
    %285 = arith.addf %280, %284 : vector<1x128xf32>
    %c3_77 = arith.constant 3 : index
    %c0_78 = arith.constant 0 : index
    %286 = vector.load %arg1[%c3_77, %c0_78] : memref<8x256xf32, #tpu.memory_space<vmem>>, vector<1x128xf32>
    %287 = arith.mulf %286, %285 : vector<1x128xf32>
    %288 = vector.shape_cast %287 : vector<1x128xf32> to vector<1x1x128xf32>
    %cst_79 = arith.constant dense<0.000000e+00> : vector<1xf32>
    %289 = vector.multi_reduction <add>, %288, %cst_79 [1, 2] : vector<1x1x128xf32> to vector<1xf32>
    %290 = vector.shape_cast %289 : vector<1xf32> to vector<1x1x1xf32>
    %291 = vector.extract %290[0, 0, 0] : f32 from vector<1x1x1xf32>
    %c2_80 = arith.constant 2 : index
    %292 = memref.load %arg2[%c2_80] : memref<4xf32, #tpu.memory_space<smem>>
    %293 = arith.mulf %291, %292 : f32
    %c4_81 = arith.constant 4 : index
    %c0_82 = arith.constant 0 : index
    %294 = vector.load %arg1[%c4_81, %c0_82] : memref<8x256xf32, #tpu.memory_space<vmem>>, vector<1x128xf32>
    %c5_83 = arith.constant 5 : index
    %c0_84 = arith.constant 0 : index
    %295 = vector.load %arg1[%c5_83, %c0_84] : memref<8x256xf32, #tpu.memory_space<vmem>>, vector<1x128xf32>
    %296 = arith.subf %294, %295 : vector<1x128xf32>
    %c6_85 = arith.constant 6 : index
    %c0_86 = arith.constant 0 : index
    %297 = vector.load %arg1[%c6_85, %c0_86] : memref<8x256xf32, #tpu.memory_space<vmem>>, vector<1x128xf32>
    %298 = arith.mulf %297, %296 : vector<1x128xf32>
    %299 = arith.mulf %298, %296 : vector<1x128xf32>
    %300 = vector.shape_cast %299 : vector<1x128xf32> to vector<1x1x128xf32>
    %cst_87 = arith.constant dense<0.000000e+00> : vector<1xf32>
    %301 = vector.multi_reduction <add>, %300, %cst_87 [1, 2] : vector<1x1x128xf32> to vector<1xf32>
    %302 = vector.shape_cast %301 : vector<1xf32> to vector<1x1x1xf32>
    %303 = vector.extract %302[0, 0, 0] : f32 from vector<1x1x1xf32>
    %c3_88 = arith.constant 3 : index
    %304 = memref.load %arg2[%c3_88] : memref<4xf32, #tpu.memory_space<smem>>
    %305 = arith.mulf %303, %304 : f32
    %c0_89 = arith.constant 0 : index
    %306 = memref.load %arg3[%c0_89] : memref<6xf32, #tpu.memory_space<smem>>
    memref.store %133, %arg3[%c0_89] : memref<6xf32, #tpu.memory_space<smem>>
    %c1_90 = arith.constant 1 : index
    %307 = memref.load %arg3[%c1_90] : memref<6xf32, #tpu.memory_space<smem>>
    memref.store %156, %arg3[%c1_90] : memref<6xf32, #tpu.memory_space<smem>>
    %c2_91 = arith.constant 2 : index
    %308 = memref.load %arg3[%c2_91] : memref<6xf32, #tpu.memory_space<smem>>
    memref.store %135, %arg3[%c2_91] : memref<6xf32, #tpu.memory_space<smem>>
    %c3_92 = arith.constant 3 : index
    %309 = memref.load %arg3[%c3_92] : memref<6xf32, #tpu.memory_space<smem>>
    memref.store %293, %arg3[%c3_92] : memref<6xf32, #tpu.memory_space<smem>>
    %c4_93 = arith.constant 4 : index
    %310 = memref.load %arg3[%c4_93] : memref<6xf32, #tpu.memory_space<smem>>
    memref.store %305, %arg3[%c4_93] : memref<6xf32, #tpu.memory_space<smem>>
    %311 = arith.addf %133, %156 : f32
    %312 = arith.addf %311, %135 : f32
    %313 = arith.addf %312, %293 : f32
    %314 = arith.addf %313, %305 : f32
    %c5_94 = arith.constant 5 : index
    %315 = memref.load %arg3[%c5_94] : memref<6xf32, #tpu.memory_space<smem>>
    memref.store %314, %arg3[%c5_94] : memref<6xf32, #tpu.memory_space<smem>>
    return
  }
}

</mosaic_0001>

<llo_original>
// kernel: _loss_forward.1
$region0: #{_loss_forward.1}
  #allocation0 [shape = 'u32[]', space=smem, size = 0x4, offset = 0x4, fixed_abs, tag = 'smem constant byte address 0x4 - core index']
  #allocation1 [shape = 'u32[144,128]{1,0:T(1,128)}', space=vmem, size = 0x12000, scoped, tag = 'internal scratch']
  %s0 = inlined_call_operand.vmem [shape: f32[19,8,128], index: 0, kind: input, shape index: {}]
  %s1 = inlined_call_operand.vmem [shape: f32[8,256], index: 1, kind: input, shape index: {}]
  %s2 = inlined_call_operand.vmem [shape: f32[4], index: 2, kind: input, shape index: {}]
  %s3 = inlined_call_operand.vmem [shape: f32[6], index: 3, kind: output, shape index: {}]
  %s4 = sld [smem:[#allocation0]]
  $region26: #{_loss_forward.1} parent=0
    _
  %s6 = ssub.s32 1, %s4
  %s7 = scalar_select 0, %s6, %s4
  $region1: #{_loss_forward.1} parent=0
    #allocation2 [shape = 'u8[512]{0}', space=smem, size = 0x200, scoped, tag = 'input window, operand 2, single buffered']
    #allocation3 [shape = 's32[1]{0}', space=sflag, size = 0x4, scoped, tag = 'scoped memory for _loss_forward.1']
    #allocation4 [shape = 's32[1]{0}', space=sflag, size = 0x4, scoped, tag = 'scoped memory for _loss_forward.1']
    #allocation5 [shape = 'u8[512]{0}', space=smem, size = 0x200, scoped, tag = 'output window, operand 0, single buffered']
    %8 = vsyncpa [#allocation3], 0
    %9 = vsyncpa [#allocation4], 0
    // Predicated region
    $region2: #{_loss_forward.1} parent=1 // pred_check
      _
    $region3: #{_loss_forward.1} parent=1 // pred_check_branch
      %11 = sbr.rel (0) target = $region5
    $region4: #{_loss_forward.1} parent=1 // pred_region
      _
    $region5: #{_loss_forward.1} parent=1 // pred_fallthru
      _
    // Predicated region
    $region6: #{_loss_forward.1} parent=1 // pred_check
      _
    $region7: #{_loss_forward.1} parent=1 // pred_check_branch
      %13 = sbr.rel (0) target = $region9
    $region8: #{_loss_forward.1} parent=1 // pred_region
      _
    $region9: #{_loss_forward.1} parent=1 // pred_fallthru
      _
    // Predicated region
    $region10: #{_loss_forward.1} parent=1 // pred_check
      _
    $region11: #{_loss_forward.1} parent=1 // pred_check_branch
      %15 = sbr.rel (0) target = $region13
    $region12: #{_loss_forward.1} parent=1 // pred_region
      %s17 = ssub.s32 16, 16
      %18 = vsyncadd [#allocation3], %s17
      %s20 = sshll.u32 %s2, 4
      %s21 = int_to_ptr.vmem [resolvable:$true] %s20
      %23 = dma.vmem_to_smem %s21, 16, [#allocation2], [#allocation3]
    $region13: #{_loss_forward.1} parent=1 // pred_fallthru
      _
    // Predicated region
    $region14: #{_loss_forward.1} parent=1 // pred_check
      _
    $region15: #{_loss_forward.1} parent=1 // pred_check_branch
      %25 = sbr.rel (0) target = $region17
    $region16: #{_loss_forward.1} parent=1 // pred_region
      %26 = dma.done [#allocation3], 16
    $region17: #{_loss_forward.1} parent=1 // pred_fallthru
      _
    %27 = sfence
    %v28 = vld [vmem:[%s0] sm:$0xff]
    %s29 = scalar_lea.vmem %s0, 24
    %v30 = vld [vmem:[%s29] sm:$0xff]
    %v31 = vadd.f32 %v28, %v28
    %v32 = vmul.f32 %v31, 0.5
    %v33 = vadd.f32 %v30, %v30
    %v34 = vmul.f32 %v33, 0.5
    %v35 = vsub.f32 %v32, %v34
    %v36 = vsub.f32 %v28, %v30
    %38 = vset.pattern.permute.xlu0 17
    %39 = vperm.xlu0 %38, %v35
    %v40 = vpop.permute.xlu0 %39
    %v42 = vsub.f32 %v36, %v40
    %v43 = vmul.f32 %v42, %v42
    %s44 = scalar_lea.vmem %s0, 8
    %v45 = vld [vmem:[%s44] sm:$0xff]
    %s46 = scalar_lea.vmem %s0, 32
    %v47 = vld [vmem:[%s46] sm:$0xff]
    %v48 = vadd.f32 %v45, %v45
    %v49 = vmul.f32 %v48, 0.5
    %v50 = vadd.f32 %v47, %v47
    %v51 = vmul.f32 %v50, 0.5
    %v52 = vsub.f32 %v49, %v51
    %v53 = vsub.f32 %v45, %v47
    %55 = vset.pattern.permute.xlu0 17
    %56 = vperm.xlu0 %55, %v52
    %v57 = vpop.permute.xlu0 %56
    %v59 = vsub.f32 %v53, %v57
    %v60 = vmul.f32 %v59, %v59
    %v61 = vadd.f32 %v43, %v60
    %s62 = scalar_lea.vmem %s0, 16
    %v63 = vld [vmem:[%s62] sm:$0xff]
    %s64 = scalar_lea.vmem %s0, 40
    %v65 = vld [vmem:[%s64] sm:$0xff]
    %v66 = vadd.f32 %v63, %v63
    %v67 = vmul.f32 %v66, 0.5
    %v68 = vadd.f32 %v65, %v65
    %v69 = vmul.f32 %v68, 0.5
    %v70 = vsub.f32 %v67, %v69
    %v71 = vsub.f32 %v63, %v65
    %73 = vset.pattern.permute.xlu0 17
    %74 = vperm.xlu0 %73, %v70
    %v75 = vpop.permute.xlu0 %74
    %v77 = vsub.f32 %v71, %v75
    %v78 = vmul.f32 %v77, %v77
    %v79 = vadd.f32 %v61, %v78
    %s80 = scalar_lea.vmem %s0, 136
    %v81 = vld [vmem:[%s80] sm:$0xff]
    %v82 = vmul.f32 %v81, %v79
    %83 = vadd.xlane.f32.xlu0 %v82
    %v84 = vpop.xlane.xlu0 %83
    %v85 = vrot.slane %v84, 4
    %v86 = vadd.f32 %v84, %v85
    %v87 = vrot.slane %v86, 2
    %v88 = vadd.f32 %v86, %v87
    %v89 = vrot.slane %v88, 1
    %v90 = vadd.f32 %v88, %v89
    %s91 = vtos %v90
    %s92 = scalar_lea.vmem %s0, 48
    %v93 = vld [vmem:[%s92] sm:$0xff]
    %s94 = scalar_lea.vmem %s0, 72
    %v95 = vld [vmem:[%s94] sm:$0xff]
    %97 = vrot.lane.b32.xlu0 %v93, 127
    %v98 = vpop.permute.xlu0 %97
    %v100 = vadd.f32 %v93, %v98
    %v101 = vmul.f32 %v100, 0.5
    %103 = vrot.lane.b32.xlu0 %v95, 127
    %v104 = vpop.permute.xlu0 %103
    %v106 = vadd.f32 %v95, %v104
    %v107 = vmul.f32 %v106, 0.5
    %v108 = vsub.f32 %v101, %v107
    %v109 = vsub.f32 %v93, %v95
    %111 = vset.pattern.permute.xlu0 2
    %112 = vperm.xlu0 %111, %v108
    %v113 = vpop.permute.xlu0 %112
    %v115 = vsub.f32 %v109, %v113
    %v116 = vmul.f32 %v115, %v115
    %s117 = scalar_lea.vmem %s0, 56
    %v118 = vld [vmem:[%s117] sm:$0xff]
    %s119 = scalar_lea.vmem %s0, 80
    %v120 = vld [vmem:[%s119] sm:$0xff]
    %122 = vrot.lane.b32.xlu0 %v118, 127
    %v123 = vpop.permute.xlu0 %122
    %v125 = vadd.f32 %v118, %v123
    %v126 = vmul.f32 %v125, 0.5
    %128 = vrot.lane.b32.xlu0 %v120, 127
    %v129 = vpop.permute.xlu0 %128
    %v131 = vadd.f32 %v120, %v129
    %v132 = vmul.f32 %v131, 0.5
    %v133 = vsub.f32 %v126, %v132
    %v134 = vsub.f32 %v118, %v120
    %136 = vset.pattern.permute.xlu0 2
    %137 = vperm.xlu0 %136, %v133
    %v138 = vpop.permute.xlu0 %137
    %v140 = vsub.f32 %v134, %v138
    %v141 = vmul.f32 %v140, %v140
    %v142 = vadd.f32 %v116, %v141
    %s143 = scalar_lea.vmem %s0, 64
    %v144 = vld [vmem:[%s143] sm:$0xff]
    %s145 = scalar_lea.vmem %s0, 88
    %v146 = vld [vmem:[%s145] sm:$0xff]
    %148 = vrot.lane.b32.xlu0 %v144, 127
    %v149 = vpop.permute.xlu0 %148
    %v151 = vadd.f32 %v144, %v149
    %v152 = vmul.f32 %v151, 0.5
    %154 = vrot.lane.b32.xlu0 %v146, 127
    %v155 = vpop.permute.xlu0 %154
    %v157 = vadd.f32 %v146, %v155
    %v158 = vmul.f32 %v157, 0.5
    %v159 = vsub.f32 %v152, %v158
    %v160 = vsub.f32 %v144, %v146
    %162 = vset.pattern.permute.xlu0 2
    %163 = vperm.xlu0 %162, %v159
    %v164 = vpop.permute.xlu0 %163
    %v166 = vsub.f32 %v160, %v164
    %v167 = vmul.f32 %v166, %v166
    %v168 = vadd.f32 %v142, %v167
    %s169 = scalar_lea.vmem %s0, 144
    %v170 = vld [vmem:[%s169] sm:$0xff]
    %v171 = vmul.f32 %v170, %v168
    %172 = vadd.xlane.f32.xlu0 %v171
    %v173 = vpop.xlane.xlu0 %172
    %v174 = vrot.slane %v173, 4
    %v175 = vadd.f32 %v173, %v174
    %v176 = vrot.slane %v175, 2
    %v177 = vadd.f32 %v175, %v176
    %v178 = vrot.slane %v177, 1
    %v179 = vadd.f32 %v177, %v178
    %s180 = vtos %v179
    %s181 = sld [smem:[#allocation2]]
    %s182 = smul.f32 %s91, %s181
    %s183 = sld [smem:[#allocation2 + $0x1]]
    %s184 = smul.f32 %s180, %s183
    %s185 = scalar_lea.vmem %s0, 96
    %v186 = vld [vmem:[%s185] sm:$0xff]
    %s187 = scalar_lea.vmem %s0, 112
    %v188 = vld [vmem:[%s187] sm:$0xff]
    %v189 = vsub.f32 %v186, %v188
    %s190 = scalar_lea.vmem %s0, 104
    %v191 = vld [vmem:[%s190] sm:$0xff]
    %s192 = scalar_lea.vmem %s0, 120
    %v193 = vld [vmem:[%s192] sm:$0xff]
    %v194 = vsub.f32 %v191, %v193
    %s195 = scalar_lea.vmem %s0, 128
    %v196 = vld [vmem:[%s195] sm:$0xff]
    %v197 = vmul.f32 %v189, %v189
    %v198 = vmul.f32 %v194, %v194
    %v199 = vadd.f32 %v197, %v198
    %v200 = vmul.f32 %v196, %v199
    %201 = vadd.xlane.f32.xlu0 %v200
    %v202 = vpop.xlane.xlu0 %201
    %v203 = vrot.slane %v202, 4
    %v204 = vadd.f32 %v202, %v203
    %v205 = vrot.slane %v204, 2
    %v206 = vadd.f32 %v204, %v205
    %v207 = vrot.slane %v206, 1
    %v208 = vadd.f32 %v206, %v207
    %s209 = vtos %v208
    %s210 = smul.f32 %s209, 0.15306123
    %v211 = vld [vmem:[%s1] ss:$8 sm:$0x3]
    %v212 = vadd.f32 %v211, 1e-08
    %s213 = scalar_lea.vmem %s1, 1
    %v214 = vld [vmem:[%s213] ss:$8 sm:$0x3]
    %v215 = vadd.f32 %v214, 1e-08
    %s216 = scalar_lea.vmem %s1, 2
    %v217 = vld [vmem:[%s216] ss:$8 sm:$0x3]
    %v218 = vadd.f32 %v217, 1e-08
    %v219 = vmul.f32 %v212, %v212
    %v220 = vmul.f32 %v215, %v215
    %v221 = vadd.f32 %v219, %v220
    %v222 = vmul.f32 %v218, %v218
    %v223 = vadd.f32 %v221, %v222
    %v224 = vrsqrt.pop %v223
    %v225 = vmul.f32 %v223, %v224
    %v226 = vmul.f32 %v225, 0.5
    %v227 = vand.u32 2147483647, %v226
    %vm228 = vcmp.le.f32.partialorder %v227, 0.7853982
    %vm229 = vcmp.lt.s32.totalorder %v226, 0
    %v230 = vand.u32 %v226, 2139095040
    %v231 = vshrl.u32 %v230, 23
    %v232 = vsub.s32 %v231, 127
    %v233 = vand.u32 2147483647, %v226
    %v234 = vand.u32 %v233, 8388607
    %v235 = vor.u32 %v234, 8388608
    %v236 = vsub.s32 0, %v235
    %v237 = vadd.s32 %v232, 1
    %vm238 = vcmp.gt.s32.totalorder %v237, 0
    %v239 = vsel %vm238, %v237, 0
    %v240 = vshrl.u32 %v239, 5
    %v241 = vand.u32 %v239, 31
    %v242 = vsub.s32 32, %v241
    %v243 = vshrl.u32 683565275, %v242
    %v244 = vshll.u32 683565275, %v241
    %v245 = vshrl.u32 2475754826, %v242
    %v246 = vor.u32 %v244, %v245
    %v247 = vshll.u32 2475754826, %v241
    %v248 = vshrl.u32 2131351028, %v242
    %v249 = vor.u32 %v247, %v248
    %v250 = vshll.u32 2131351028, %v241
    %v251 = vshrl.u32 2102212464, %v242
    %v252 = vor.u32 %v250, %v251
    %v253 = vshll.u32 2102212464, %v241
    %v254 = vshrl.u32 920167782, %v242
    %v255 = vor.u32 %v253, %v254
    %v256 = vshll.u32 920167782, %v241
    %v257 = vshrl.u32 1326507024, %v242
    %v258 = vor.u32 %v256, %v257
    %vm259 = vcmp.lt.s32.totalorder %v240, 1
    %vm260 = vcmp.lt.s32.totalorder %v240, 2
    %vm261 = vcmp.lt.s32.totalorder %v240, 3
    %vm262 = vcmp.lt.s32.totalorder %v240, 4
    %v263 = vsel %vm259, %v243, %v246
    %v264 = vsel %vm262, %v252, 2102212464
    %v265 = vsel %vm261, %v249, %v264
    %v266 = vsel %vm260, %v263, %v265
    %v267 = vsel %vm259, %v246, %v249
    %v268 = vsel %vm262, %v255, 920167782
    %v269 = vsel %vm261, %v252, %v268
    %v270 = vsel %vm260, %v267, %v269
    %v271 = vsel %vm259, %v249, %v252
    %v272 = vsel %vm262, %v258, 1326507024
    %v273 = vsel %vm261, %v255, %v272
    %v274 = vsel %vm260, %v271, %v273
    %v275 = vshll.u32 %v235, 8
    %v276 = vmul.u32.u64.compose %v275, %v274
    %v277 = vextract.low.u32 %v276
    %v278 = vextract.high.u32 %v276
    %v279 = vmul.u32.u64.compose %v275, %v270
    %v280 = vextract.low.u32 %v279
    %v281 = vextract.high.u32 %v279
    %v282 = vmul.u32 %v275, %v266
    %v283 = vadd.s32 %v278, %v280
    %vm284 = vc.u32 %v278, %v280
    %v285 = vadd.s32 %v281, 1
    %v286 = vsel %vm284, %v285, %v281
    %v287 = vadd.s32 %v282, %v286
    %v288 = vadd.s32 %v287, 536870912
    %v289 = vshrl.u32 %v288, 30
    %v290 = vshll.u32 %v289, 30
    %v291 = vsub.s32 %v287, %v290
    %vm292 = vcmp.lt.s32.totalorder %v291, 0
    %v293 = vsub.s32 0, %v291
    %v294 = vsel %vm292, %v293, %v291
    %v295 = vclz %v294
    %v296 = vsub.s32 %v295, 2
    %vm297 = vcmp.gt.s32.totalorder 0, %v296
    %v298 = vsel %vm297, 0, %v296
    %v299 = vsub.s32 32, %v298
    %v300 = vshll.u32 %v291, %v298
    %v301 = vshrl.u32 %v283, %v299
    %v302 = vor.u32 %v300, %v301
    %v303 = vsub.s32 4294967266, %v298
    %v304 = vadd.s32 %v303, 127
    %v305 = vshll.u32 %v304, 23
    %v306 = vor.u32 4788187, %v305
    %v307 = vand.u32 2147483647, %v306
    %v309 = vcvt.s32.f32 %v302
    %v310 = vmul.f32 %v309, %v307
    %v311 = vxor.u32 %v310, 2147483648
    %v312 = vsel %vm229, %v311, %v310
    %v313 = vsub.s32 4, %v289
    %v314 = vsel %vm229, %v313, %v289
    %v315 = vsel %vm228, %v226, %v312
    %v316 = vsel %vm228, 0, %v314
    %v317 = vcosq.f32.pop %v315
    %v318 = vsinq.f32.pop %v315
    %vm319 = vweird.f32 %v226
    %v320 = vand.u32 %v316, 3
    %vm321 = vcmp.lt.s32.totalorder %v320, 2
    %vm322 = vcmp.eq.s32.totalorder %v320, 0
    %v323 = vxor.u32 %v318, 2147483648
    %v324 = vsel %vm322, %v317, %v323
    %vm325 = vcmp.eq.s32.totalorder %v320, 2
    %v326 = vxor.u32 %v317, 2147483648
    %v327 = vsel %vm325, %v326, %v318
    %v328 = vsel %vm321, %v324, %v327
    %v329 = vsel %vm319, nan, %v328
    %v330 = vand.u32 2147483647, %v226
    %vm331 = vcmp.le.f32.partialorder %v330, 0.7853982
    %vm332 = vcmp.lt.s32.totalorder %v226, 0
    %v333 = vand.u32 %v226, 2139095040
    %v334 = vshrl.u32 %v333, 23
    %v335 = vsub.s32 %v334, 127
    %v336 = vand.u32 2147483647, %v226
    %v337 = vand.u32 %v336, 8388607
    %v338 = vor.u32 %v337, 8388608
    %v339 = vsub.s32 0, %v338
    %v340 = vadd.s32 %v335, 1
    %vm341 = vcmp.gt.s32.totalorder %v340, 0
    %v342 = vsel %vm341, %v340, 0
    %v343 = vshrl.u32 %v342, 5
    %v344 = vand.u32 %v342, 31
    %v345 = vsub.s32 32, %v344
    %v346 = vshrl.u32 683565275, %v345
    %v347 = vshll.u32 683565275, %v344
    %v348 = vshrl.u32 2475754826, %v345
    %v349 = vor.u32 %v347, %v348
    %v350 = vshll.u32 2475754826, %v344
    %v351 = vshrl.u32 2131351028, %v345
    %v352 = vor.u32 %v350, %v351
    %v353 = vshll.u32 2131351028, %v344
    %v354 = vshrl.u32 2102212464, %v345
    %v355 = vor.u32 %v353, %v354
    %v356 = vshll.u32 2102212464, %v344
    %v357 = vshrl.u32 920167782, %v345
    %v358 = vor.u32 %v356, %v357
    %v359 = vshll.u32 920167782, %v344
    %v360 = vshrl.u32 1326507024, %v345
    %v361 = vor.u32 %v359, %v360
    %vm362 = vcmp.lt.s32.totalorder %v343, 1
    %vm363 = vcmp.lt.s32.totalorder %v343, 2
    %vm364 = vcmp.lt.s32.totalorder %v343, 3
    %vm365 = vcmp.lt.s32.totalorder %v343, 4
    %v366 = vsel %vm362, %v346, %v349
    %v367 = vsel %vm365, %v355, 2102212464
    %v368 = vsel %vm364, %v352, %v367
    %v369 = vsel %vm363, %v366, %v368
    %v370 = vsel %vm362, %v349, %v352
    %v371 = vsel %vm365, %v358, 920167782
    %v372 = vsel %vm364, %v355, %v371
    %v373 = vsel %vm363, %v370, %v372
    %v374 = vsel %vm362, %v352, %v355
    %v375 = vsel %vm365, %v361, 1326507024
    %v376 = vsel %vm364, %v358, %v375
    %v377 = vsel %vm363, %v374, %v376
    %v378 = vshll.u32 %v338, 8
    %v379 = vmul.u32.u64.compose %v378, %v377
    %v380 = vextract.low.u32 %v379
    %v381 = vextract.high.u32 %v379
    %v382 = vmul.u32.u64.compose %v378, %v373
    %v383 = vextract.low.u32 %v382
    %v384 = vextract.high.u32 %v382
    %v385 = vmul.u32 %v378, %v369
    %v386 = vadd.s32 %v381, %v383
    %vm387 = vc.u32 %v381, %v383
    %v388 = vadd.s32 %v384, 1
    %v389 = vsel %vm387, %v388, %v384
    %v390 = vadd.s32 %v385, %v389
    %v391 = vadd.s32 %v390, 536870912
    %v392 = vshrl.u32 %v391, 30
    %v393 = vshll.u32 %v392, 30
    %v394 = vsub.s32 %v390, %v393
    %vm395 = vcmp.lt.s32.totalorder %v394, 0
    %v396 = vsub.s32 0, %v394
    %v397 = vsel %vm395, %v396, %v394
    %v398 = vclz %v397
    %v399 = vsub.s32 %v398, 2
    %vm400 = vcmp.gt.s32.totalorder 0, %v399
    %v401 = vsel %vm400, 0, %v399
    %v402 = vsub.s32 32, %v401
    %v403 = vshll.u32 %v394, %v401
    %v404 = vshrl.u32 %v386, %v402
    %v405 = vor.u32 %v403, %v404
    %v406 = vsub.s32 4294967266, %v401
    %v407 = vadd.s32 %v406, 127
    %v408 = vshll.u32 %v407, 23
    %v409 = vor.u32 4788187, %v408
    %v410 = vand.u32 2147483647, %v409
    %v412 = vcvt.s32.f32 %v405
    %v413 = vmul.f32 %v412, %v410
    %v414 = vxor.u32 %v413, 2147483648
    %v415 = vsel %vm332, %v414, %v413
    %v416 = vsub.s32 4, %v392
    %v417 = vsel %vm332, %v416, %v392
    %v418 = vsel %vm331, %v226, %v415
    %v419 = vsel %vm331, 0, %v417
    %v420 = vcosq.f32.pop %v418
    %v421 = vsinq.f32.pop %v418
    %vm422 = vweird.f32 %v226
    %v423 = vadd.s32 %v419, 3
    %v424 = vand.u32 %v423, 3
    %vm425 = vcmp.lt.s32.totalorder %v424, 2
    %vm426 = vcmp.eq.s32.totalorder %v424, 0
    %v427 = vxor.u32 %v421, 2147483648
    %v428 = vsel %vm426, %v420, %v427
    %vm429 = vcmp.eq.s32.totalorder %v424, 2
    %v430 = vxor.u32 %v420, 2147483648
    %v431 = vsel %vm429, %v430, %v421
    %v432 = vsel %vm425, %v428, %v431
    %v433 = vsel %vm422, nan, %v432
    %v434 = vmul.f32 %v433, %v224
    %v435 = vmul.f32 %v434, %v212
    %v436 = vmul.f32 %v434, %v215
    %v437 = vmul.f32 %v434, %v218
    %v438 = vmul.f32 %v329, %v329
    %v439 = vmul.f32 %v435, %v435
    %v440 = vadd.f32 %v438, %v439
    %v441 = vmul.f32 %v436, %v436
    %v442 = vadd.f32 %v440, %v441
    %v443 = vmul.f32 %v437, %v437
    %v444 = vadd.f32 %v442, %v443
    %v445 = vrsqrt.pop %v444
    %v446 = vmul.f32 %v329, %v445
    %v447 = vmul.f32 %v435, %v445
    %v448 = vmul.f32 %v436, %v445
    %v449 = vmul.f32 %v437, %v445
    %v450 = vmul.f32 %v446, %v446
    %v451 = vmul.f32 %v447, %v447
    %v452 = vmul.f32 %v448, %v448
    %v453 = vmul.f32 %v449, %v449
    %v454 = vmul.f32 %v446, %v447
    %v455 = vmul.f32 %v446, %v448
    %v456 = vmul.f32 %v446, %v449
    %v457 = vmul.f32 %v447, %v448
    %v458 = vmul.f32 %v447, %v449
    %v459 = vmul.f32 %v448, %v449
    %v460 = vadd.f32 %v450, %v451
    %v461 = vsub.f32 %v460, %v452
    %v462 = vsub.f32 %v461, %v453
    %v463 = vmul.f32 %v457, 2.0
    %v464 = vmul.f32 %v456, 2.0
    %v465 = vsub.f32 %v463, %v464
    %v466 = vmul.f32 %v455, 2.0
    %v467 = vmul.f32 %v458, 2.0
    %v468 = vadd.f32 %v466, %v467
    %v469 = vadd.f32 %v464, %v463
    %v470 = vsub.f32 %v450, %v451
    %v471 = vadd.f32 %v470, %v452
    %v472 = vsub.f32 %v471, %v453
    %v473 = vmul.f32 %v459, 2.0
    %v474 = vmul.f32 %v454, 2.0
    %v475 = vsub.f32 %v473, %v474
    %v476 = vsub.f32 %v467, %v466
    %v477 = vadd.f32 %v474, %v473
    %v478 = vsub.f32 %v470, %v452
    %v479 = vadd.f32 %v478, %v453
    %v481 = vrot.slane %v462, 1
    %v483 = vsub.f32 %v462, %v481
    %v484 = vmul.f32 %v483, %v483
    %v486 = vrot.slane %v465, 1
    %v488 = vsub.f32 %v465, %v486
    %v489 = vmul.f32 %v488, %v488
    %v490 = vadd.f32 %v484, %v489
    %v492 = vrot.slane %v468, 1
    %v494 = vsub.f32 %v468, %v492
    %v495 = vmul.f32 %v494, %v494
    %v496 = vadd.f32 %v490, %v495
    %v498 = vrot.slane %v469, 1
    %v500 = vsub.f32 %v469, %v498
    %v501 = vmul.f32 %v500, %v500
    %v502 = vadd.f32 %v496, %v501
    %v504 = vrot.slane %v472, 1
    %v506 = vsub.f32 %v472, %v504
    %v507 = vmul.f32 %v506, %v506
    %v508 = vadd.f32 %v502, %v507
    %v510 = vrot.slane %v475, 1
    %v512 = vsub.f32 %v475, %v510
    %v513 = vmul.f32 %v512, %v512
    %v514 = vadd.f32 %v508, %v513
    %v516 = vrot.slane %v476, 1
    %v518 = vsub.f32 %v476, %v516
    %v519 = vmul.f32 %v518, %v518
    %v520 = vadd.f32 %v514, %v519
    %v522 = vrot.slane %v477, 1
    %v524 = vsub.f32 %v477, %v522
    %v525 = vmul.f32 %v524, %v524
    %v526 = vadd.f32 %v520, %v525
    %v528 = vrot.slane %v479, 1
    %v530 = vsub.f32 %v479, %v528
    %v531 = vmul.f32 %v530, %v530
    %v532 = vadd.f32 %v526, %v531
    %v533 = vld [vmem:[%s1 + $0x3] ss:$0 sm:$0xff]
    %v534 = vmul.f32 %v533, %v532
    %vm535 = vcmask 1040384
    %v536 = vsel %vm535, %v534, 0.0
    %537 = vadd.xlane.f32.xlu0 %v536
    %v538 = vpop.xlane.xlu0 %537
    %v539 = vrot.slane %v538, 4
    %v540 = vadd.f32 %v538, %v539
    %v541 = vrot.slane %v540, 2
    %v542 = vadd.f32 %v540, %v541
    %v543 = vrot.slane %v542, 1
    %v544 = vadd.f32 %v542, %v543
    %s545 = vtos %v544
    %s546 = sld [smem:[#allocation2 + $0x2]]
    %s547 = smul.f32 %s545, %s546
    %v548 = vld [vmem:[%s1 + $0x4] ss:$0 sm:$0xff]
    %v549 = vld [vmem:[%s1 + $0x5] ss:$0 sm:$0xff]
    %v550 = vsub.f32 %v548, %v549
    %v551 = vld [vmem:[%s1 + $0x6] ss:$0 sm:$0xff]
    %v552 = vmul.f32 %v551, %v550
    %v553 = vmul.f32 %v552, %v550
    %v554 = vsel %vm535, %v553, 0.0
    %555 = vadd.xlane.f32.xlu0 %v554
    %v556 = vpop.xlane.xlu0 %555
    %v557 = vrot.slane %v556, 4
    %v558 = vadd.f32 %v556, %v557
    %v559 = vrot.slane %v558, 2
    %v560 = vadd.f32 %v558, %v559
    %v561 = vrot.slane %v560, 1
    %v562 = vadd.f32 %v560, %v561
    %s563 = vtos %v562
    %s564 = sld [smem:[#allocation2 + $0x3]]
    %s565 = smul.f32 %s563, %s564
    %s566 = scalar_lea.smem [#allocation5], 0
    %567 = sst [smem:[%s566]] %s182
    %s568 = scalar_lea.smem [#allocation5], 1
    %569 = sst [smem:[%s568]] %s210
    %s570 = scalar_lea.smem [#allocation5], 2
    %571 = sst [smem:[%s570]] %s184
    %s572 = scalar_lea.smem [#allocation5], 3
    %573 = sst [smem:[%s572]] %s547
    %s574 = scalar_lea.smem [#allocation5], 4
    %575 = sst [smem:[%s574]] %s565
    %s576 = sadd.f32 %s182, %s210
    %s577 = sadd.f32 %s576, %s184
    %s578 = sadd.f32 %s577, %s547
    %s579 = sadd.f32 %s578, %s565
    %s580 = scalar_lea.smem [#allocation5], 5
    %581 = sst [smem:[%s580]] %s579
    // Predicated region
    $region18: #{_loss_forward.1} parent=1 // pred_check
      _
    $region19: #{_loss_forward.1} parent=1 // pred_check_branch
      %583 = sbr.rel (0) target = $region21
    $region20: #{_loss_forward.1} parent=1 // pred_region
      %s585 = ssub.s32 16, 16
      %586 = vsyncadd [#allocation4], %s585
      %s588 = sshll.u32 %s3, 4
      %s589 = int_to_ptr.vmem [resolvable:$true] %s588
      %591 = dma.smem_to_vmem [#allocation5], 16, %s589, [#allocation4]
    $region21: #{_loss_forward.1} parent=1 // pred_fallthru
      _
    // Predicated region
    $region22: #{_loss_forward.1} parent=1 // pred_check
      _
    $region23: #{_loss_forward.1} parent=1 // pred_check_branch
      %593 = sbr.rel (0) target = $region25
    $region24: #{_loss_forward.1} parent=1 // pred_region
      %594 = dma.done [#allocation4], 16
    $region25: #{_loss_forward.1} parent=1 // pred_fallthru
      _
    %595 = sfence
    %596 = vsyncpa [#allocation3], 1
    %597 = vsyncpa [#allocation4], 1

</llo_original>
